<compile_context>
chip_gen: v7x
topology: tpu7x:2x2x1
jax: 0.10.0
libtpu: 0.0.40
codegen_flags: <defaults>
</compile_context>

<pallas_src>
import functools
import math

import jax
import jax.numpy as jnp
from jax.experimental import pallas as pl
from jax.experimental.pallas import tpu as pltpu


def _round_up(x, m):
    return ((x + m - 1) // m) * m


# ----------------------------------------------------------------------------
# Pallas kernel: tiled GEMM + bias + optional ReLU epilogue
#   y[M, N] = relu_opt( x[M, K] @ w[K, N] + bias[1, N] )
# BN scale is pre-folded into the weight columns by the wrapper.
# ----------------------------------------------------------------------------
def _gemm_bias_relu_kernel(x_ref, w_ref, bias_ref, o_ref, acc_ref, *, apply_relu):
    k = pl.program_id(2)
    contrib = jnp.dot(x_ref[...], w_ref[...], preferred_element_type=jnp.float32)

    @pl.when(k == 0)
    def _():
        acc_ref[...] = contrib          # direct first write: no zero-init pass

    @pl.when(k > 0)
    def _():
        acc_ref[...] += contrib

    @pl.when(k == pl.num_programs(2) - 1)
    def _():
        y = acc_ref[...] + bias_ref[...]        # f32 epilogue
        if apply_relu:
            y = jnp.maximum(y, 0.0)
        o_ref[...] = y.astype(o_ref.dtype)      # bf16 writeback


def _pick_tiles(M, K, N):
    """Tile selection per the perf review (roofline + v7x 2-TC + VMEM caps)."""
    Np = _round_up(N, 128)
    # Lane-dense output tile that exactly divides Np (128 always divides).
    tn = next(t for t in (512, 256, 128) if Np % t == 0)
    grid_n = Np // tn

    # K: full-extent single step when it fits comfortably, else a 128-aligned
    # reduction axis with the fattest dividing tile (fewer, fatter K steps ->
    # less accumulator RMW on the single vst slot).
    if K <= 2048:
        Kp, tk = K, K
    else:
        Kp = _round_up(K, 128)
        tk = next(t for t in (2048, 1024, 512, 256, 128) if Kp % t == 0)

    # M tile: 512 floor (1024 when M is large), clamped, then halved until the
    # parallel grid has >= 2 blocks so v7x's second TensorCore has work.
    tm = 1024 if M >= 4096 else 512
    tm = min(tm, _round_up(M, 128))
    while tm > 128 and pl.cdiv(M, tm) * grid_n < 2:
        tm = max(128, _round_up(tm // 2, 128))
    return tm, tk, tn, Kp, Np


def gemm_bias_relu(x, w, bias, *, apply_relu=True, out_dtype=jnp.bfloat16):
    """x: (M, K), w: (K, N) f32, bias: (N,) f32. Returns (M, N) in out_dtype."""
    M, K = x.shape
    K2, N = w.shape
    assert K == K2
    tm, tk, tn, Kp, Np = _pick_tiles(M, K, N)

    # bf16 MXU operands. Only the small weight/bias arrays are padded; the big
    # patches matrix is padded only when K > 2048 needs 128-alignment, and M
    # raggedness is absorbed by the cdiv grid (edge-block writes are clipped).
    xp = x.astype(jnp.bfloat16)
    if Kp > K:
        xp = jnp.pad(xp, ((0, 0), (0, Kp - K)))
    wp = jnp.pad(w.astype(jnp.float32),
                 ((0, Kp - K), (0, Np - N))).astype(jnp.bfloat16)
    bp = jnp.pad(bias.astype(jnp.float32).reshape(1, N), ((0, 0), (0, Np - N)))

    grid = (pl.cdiv(M, tm), Np // tn, Kp // tk)
    # Per-step VMEM (double-buffered bf16 x/w, bf16 out, f32 acc) stays well
    # under the 32 MiB scoped default even at the largest tiles, so no
    # vmem_limit_bytes override (and no v7x 64 MiB concern).
    # TODO(synk): if v5e profiling shows exposed DMA, add
    # pipeline_mode=pl.Buffered(3) on the x/w specs (don't do this on v7x).
    out = pl.pallas_call(
        functools.partial(_gemm_bias_relu_kernel, apply_relu=apply_relu),
        out_shape=jax.ShapeDtypeStruct((M, Np), out_dtype),
        grid_spec=pltpu.PrefetchScalarGridSpec(
            num_scalar_prefetch=0,
            grid=grid,
            in_specs=[
                pl.BlockSpec((tm, tk), lambda i, j, k: (i, k)),
                pl.BlockSpec((tk, tn), lambda i, j, k: (k, j)),
                pl.BlockSpec((1, tn), lambda i, j, k: (0, j)),
            ],
            out_specs=pl.BlockSpec((tm, tn), lambda i, j, k: (i, j)),
            scratch_shapes=[pltpu.VMEM((tm, tn), jnp.float32)],
        ),
        compiler_params=pltpu.CompilerParams(
            dimension_semantics=("parallel", "parallel", "arbitrary"),
        ),
    )(xp, wp, bp)
    return out[:, :N]


# ----------------------------------------------------------------------------
# JAX glue: im2col patch extraction (bf16), ConvBN wrapper
# ----------------------------------------------------------------------------
def _im2col(x_nhwc, k, stride, pad):
    N, H, W, C = x_nhwc.shape
    xp = jnp.pad(x_nhwc, ((0, 0), (pad, pad), (pad, pad), (0, 0)))
    OH = (H + 2 * pad - k) // stride + 1
    OW = (W + 2 * pad - k) // stride + 1
    taps = []
    for ki in range(k):
        for kj in range(k):
            taps.append(xp[:, ki:ki + stride * OH:stride,
                           kj:kj + stride * OW:stride, :])
    # feature order (kh, kw, c_in) -- must match the weight reshape below
    patches = jnp.stack(taps, axis=3)            # (N, OH, OW, k*k, C)
    return patches.reshape(N * OH * OW, k * k * C), (N, OH, OW)


def conv_bn_relu_nchw(x_nchw, weight_oihw, conv_bias, bn, stride,
                      with_bn=True, eps=1e-5):
    """PyTorch ConvBN.forward: conv(pad=(k-1)//2, stride) -> BN(eval) -> ReLU."""
    C_out, C_in, KH, KW = weight_oihw.shape
    assert KH == KW
    pad = (KH - 1) // 2

    # NCHW -> NHWC, bf16 so the im2col-inflated patches cost half the HBM traffic.
    x = jnp.transpose(x_nchw, (0, 2, 3, 1)).astype(jnp.bfloat16)
    patches, (N, OH, OW) = _im2col(x, KH, stride, pad)

    # (C_out, C_in, KH, KW) -> (KH, KW, C_in, C_out) -> (KH*KW*C_in, C_out), f32
    w = jnp.transpose(weight_oihw, (2, 3, 1, 0)).reshape(
        KH * KW * C_in, C_out).astype(jnp.float32)

    if with_bn:
        scale = bn["gamma"] / jnp.sqrt(bn["var"] + eps)
        shift = bn["beta"] - bn["mean"] * scale
        if conv_bias is not None:                 # correct fold if bias present
            shift = shift + scale * conv_bias
        w = w * scale[None, :]        # fold BN scale into weight columns (f32)
        bias = shift
    else:
        bias = (conv_bias if conv_bias is not None
                else jnp.zeros((C_out,), jnp.float32))

    y = gemm_bias_relu(patches, w, bias, apply_relu=True,
                       out_dtype=jnp.bfloat16)
    y = y.reshape(N, OH, OW, C_out)
    # back to NCHW, f32 at the module boundary (matches PyTorch output dtype)
    return jnp.transpose(y, (0, 3, 1, 2)).astype(jnp.float32)


# ----------------------------------------------------------------------------
# Reference (pure JAX) + deterministic param init
# ----------------------------------------------------------------------------
def convbn_reference(x_nchw, params, stride, with_bn=True, eps=1e-5):
    w = params["w"]
    pad = (w.shape[2] - 1) // 2
    y = jax.lax.conv_general_dilated(
        x_nchw, w, window_strides=(stride, stride),
        padding=((pad, pad), (pad, pad)),
        dimension_numbers=("NCHW", "OIHW", "NCHW"))
    if with_bn:
        bn = params["bn"]
        scale = bn["gamma"] / jnp.sqrt(bn["var"] + eps)
        shift = bn["beta"] - bn["mean"] * scale
        y = y * scale[None, :, None, None] + shift[None, :, None, None]
    elif params["b"] is not None:
        y = y + params["b"][None, :, None, None]
    return jnp.maximum(y, 0.0)


def init_convbn_params(key, k, inp_dim, out_dim, with_bn=True):
    kw, kb, kg, kbeta, km, kv = jax.random.split(key, 6)
    bound = 1.0 / math.sqrt(inp_dim * k * k)
    w = jax.random.uniform(kw, (out_dim, inp_dim, k, k), jnp.float32, -bound, bound)
    conv_bias = (None if with_bn
                 else jax.random.uniform(kb, (out_dim,), jnp.float32, -bound, bound))
    bn = dict(
        gamma=1.0 + 0.01 * jax.random.normal(kg, (out_dim,), jnp.float32),
        beta=0.01 * jax.random.normal(kbeta, (out_dim,), jnp.float32),
        mean=0.1 * jax.random.normal(km, (out_dim,), jnp.float32),
        var=0.5 + jax.random.uniform(kv, (out_dim,), jnp.float32),
    ) if with_bn else None
    return dict(w=w, b=conv_bias, bn=bn)


# ----------------------------------------------------------------------------
# Main
# ----------------------------------------------------------------------------
if __name__ == "__main__":
    K_SIZE, C_IN, C_OUT, STRIDE, WITH_BN = 3, 4, 16, 1, True

    key = jax.random.PRNGKey(0)
    k_param, k_x = jax.random.split(key)
    params = init_convbn_params(k_param, K_SIZE, C_IN, C_OUT, with_bn=WITH_BN)
    x = jax.random.normal(k_x, (2, C_IN, 16, 16), jnp.float32)   # NCHW

    fwd = jax.jit(functools.partial(
        conv_bn_relu_nchw, stride=STRIDE, with_bn=WITH_BN))
    out = fwd(x, params["w"], params["b"], params["bn"])
    out = jax.block_until_ready(out)
    assert out.shape == (2, C_OUT, 16, 16), out.shape

    ref = convbn_reference(x, params, STRIDE, with_bn=WITH_BN)
    max_err = float(jnp.max(jnp.abs(out - ref)))
    assert max_err < 5e-2, f"max abs err vs reference: {max_err}"

    print("KERNEL_OK")
</pallas_src>

<mosaic_0001>
module attributes {stable_mosaic.version = 11 : i64} {
  func.func @_gemm_bias_relu_kernel(%arg0: i32, %arg1: i32, %arg2: i32, %arg3: memref<256x36xbf16, #tpu.memory_space<vmem>>, %arg4: memref<36x128xbf16, #tpu.memory_space<vmem>>, %arg5: memref<1x128xf32, #tpu.memory_space<vmem>>, %arg6: memref<256x128xbf16, #tpu.memory_space<vmem>>, %arg7: memref<256x128xf32, #tpu.memory_space<vmem>>) attributes {dimension_semantics = [#tpu.dimension_semantics<parallel>, #tpu.dimension_semantics<parallel>, #tpu.dimension_semantics<arbitrary>], iteration_bounds = array<i64: 2, 1, 1>, scalar_prefetch = 0 : i64, scratch_operands = 1 : i64, tpu.core_type = #tpu.core_type<tc>, window_params = [{transform_indices = @transform_0, window_bounds = array<i64: 256, 36>}, {transform_indices = @transform_1, window_bounds = array<i64: 36, 128>}, {transform_indices = @transform_2, window_bounds = array<i64: 1, 128>}, {transform_indices = @transform_3, window_bounds = array<i64: 256, 128>}]} {
    %c0 = arith.constant 0 : index
    %c0_0 = arith.constant 0 : index
    %0 = vector.load %arg3[%c0, %c0_0] : memref<256x36xbf16, #tpu.memory_space<vmem>>, vector<256x36xbf16>
    %c0_1 = arith.constant 0 : index
    %c0_2 = arith.constant 0 : index
    %1 = vector.load %arg4[%c0_1, %c0_2] : memref<36x128xbf16, #tpu.memory_space<vmem>>, vector<36x128xbf16>
    %cst = arith.constant dense<0.000000e+00> : vector<256x128xf32>
    %2 = tpu.matmul %0, %1, %cst {dimension_numbers = #tpu.dot_dimension_numbers<[1], [0], [0], [1], [0, 0, 1, 1], [], []>} : vector<256x36xbf16>, vector<36x128xbf16>, vector<256x128xf32> -> vector<256x128xf32>
    %c0_i32 = arith.constant 0 : i32
    %3 = arith.cmpi eq, %arg2, %c0_i32 : i32
    %4 = arith.extui %3 : i1 to i32
    %c0_i32_3 = arith.constant 0 : i32
    %5 = arith.cmpi ne, %4, %c0_i32_3 : i32
    scf.if %5 {
      %c0_8 = arith.constant 0 : index
      %c0_9 = arith.constant 0 : index
      %12 = vector.load %arg7[%c0_8, %c0_9] : memref<256x128xf32, #tpu.memory_space<vmem>>, vector<256x128xf32>
      tpu.vector_store %arg7[%c0_8, %c0_9], %2 {strides = array<i32>} : memref<256x128xf32, #tpu.memory_space<vmem>>, vector<256x128xf32>,
    } else {
    }
    %c0_i32_4 = arith.constant 0 : i32
    %6 = arith.cmpi sgt, %arg2, %c0_i32_4 : i32
    %7 = arith.extui %6 : i1 to i32
    %c0_i32_5 = arith.constant 0 : i32
    %8 = arith.cmpi ne, %7, %c0_i32_5 : i32
    scf.if %8 {
      %c0_8 = arith.constant 0 : index
      %c0_9 = arith.constant 0 : index
      %12 = vector.load %arg7[%c0_8, %c0_9] : memref<256x128xf32, #tpu.memory_space<vmem>>, vector<256x128xf32>
      %13 = arith.addf %12, %2 : vector<256x128xf32>
      %c0_10 = arith.constant 0 : index
      %c0_11 = arith.constant 0 : index
      %14 = vector.load %arg7[%c0_10, %c0_11] : memref<256x128xf32, #tpu.memory_space<vmem>>, vector<256x128xf32>
      tpu.vector_store %arg7[%c0_10, %c0_11], %13 {strides = array<i32>} : memref<256x128xf32, #tpu.memory_space<vmem>>, vector<256x128xf32>,
    } else {
    }
    %c0_i32_6 = arith.constant 0 : i32
    %9 = arith.cmpi eq, %arg2, %c0_i32_6 : i32
    %10 = arith.extui %9 : i1 to i32
    %c0_i32_7 = arith.constant 0 : i32
    %11 = arith.cmpi ne, %10, %c0_i32_7 : i32
    scf.if %11 {
      %c0_8 = arith.constant 0 : index
      %c0_9 = arith.constant 0 : index
      %12 = vector.load %arg7[%c0_8, %c0_9] : memref<256x128xf32, #tpu.memory_space<vmem>>, vector<256x128xf32>
      %c0_10 = arith.constant 0 : index
      %c0_11 = arith.constant 0 : index
      %13 = vector.load %arg5[%c0_10, %c0_11] : memref<1x128xf32, #tpu.memory_space<vmem>>, vector<1x128xf32>
      %14 = vector.broadcast %13 : vector<1x128xf32> to vector<256x128xf32>
      %15 = arith.addf %12, %14 : vector<256x128xf32>
      %cst_12 = arith.constant 0.000000e+00 : f32
      %16 = vector.broadcast %cst_12 : f32 to vector<256x128xf32>
      %17 = arith.maximumf %15, %16 : vector<256x128xf32>
      %18 = arith.truncf %17 : vector<256x128xf32> to vector<256x128xbf16>
      %c0_13 = arith.constant 0 : index
      %c0_14 = arith.constant 0 : index
      %19 = vector.load %arg6[%c0_13, %c0_14] : memref<256x128xbf16, #tpu.memory_space<vmem>>, vector<256x128xbf16>
      tpu.vector_store %arg6[%c0_13, %c0_14], %18 {strides = array<i32>} : memref<256x128xbf16, #tpu.memory_space<vmem>>, vector<256x128xbf16>,
    } else {
    }
    return
  }
  func.func @transform_0(%arg0: i32, %arg1: i32, %arg2: i32) -> (i32, i32) {
    %c0_i32 = arith.constant 0 : i32
    return %arg0, %arg2 : i32, i32
  }
  func.func @transform_1(%arg0: i32, %arg1: i32, %arg2: i32) -> (i32, i32) {
    %c0_i32 = arith.constant 0 : i32
    return %arg2, %arg1 : i32, i32
  }
  func.func @transform_2(%arg0: i32, %arg1: i32, %arg2: i32) -> (i32, i32) {
    %c0_i32 = arith.constant 0 : i32
    %c0_i32_0 = arith.constant 0 : i32
    return %c0_i32, %arg1 : i32, i32
  }
  func.func @transform_3(%arg0: i32, %arg1: i32, %arg2: i32) -> (i32, i32) {
    %c0_i32 = arith.constant 0 : i32
    return %arg0, %arg1 : i32, i32
  }
}

</mosaic_0001>

<llo_original>
// kernel: conv_bn_relu_nchw.1
$region0: #{conv_bn_relu_nchw.1}
  #allocation0 [shape = 'u32[]', space=smem, size = 0x4, offset = 0x4, fixed_abs, tag = 'smem constant byte address 0x4 - core index']
  #allocation1 [shape = 'u32[144,128]{1,0:T(1,128)}', space=vmem, size = 0x12000, scoped, tag = 'internal scratch']
  #allocation2 [shape = 'f32[256,128]{1,0:T(8,128)}', space=vmem, size = 0x20000, scoped, tag = 'scratch operand']
  %s0 = inlined_call_operand.vmem [shape: bf16[512,36], index: 0, kind: input, shape index: {}]
  %s1 = inlined_call_operand.vmem [shape: bf16[36,128], index: 1, kind: input, shape index: {}]
  %s2 = inlined_call_operand.vmem [shape: f32[1,128], index: 2, kind: input, shape index: {}]
  %s3 = inlined_call_operand.vmem [shape: bf16[512,128], index: 3, kind: output, shape index: {}]
  %s4 = sld [smem:[#allocation0]]
  $region57: #{conv_bn_relu_nchw.1} parent=0
    _
  %s6 = ssub.s32 1, %s4
  %s7 = scalar_select 0, %s6, %s4
  loop: start=0, step=1, limit=4
  $region2: #{conv_bn_relu_nchw.1} parent=0 // loop_pre_header
    _
  $region3: #{conv_bn_relu_nchw.1} parent=0 // loop_header
    %s9 = sphi 0, %s13
    %p10 = scmp.ge.s32.totalorder %s9, 4
    %s16 = sphi 0, %s35
    %s17 = sphi 0, %s31
    %s18 = sphi 0, %s27
    %s19 = sphi 0, %s16
    %s20 = sphi 0, %s17
    %s21 = sphi 0, %s18
    %s22 = sphi 0, %s19
    %s23 = sphi 0, %s20
    %s24 = sphi 0, %s21
    %s40 = sphi 0, %s42
    %s43 = sphi 0, %s40
    %s44 = sphi 0, %s43
    %s60 = sphi 0, %s44
    %s68 = sphi 0, %s70
    %s71 = sphi 0, %s68
    %s72 = sphi 0, %s71
    %s88 = sphi 0, %s72
    %s94 = sphi 0, %s96
    %s97 = sphi 0, %s94
    %s98 = sphi 0, %s97
    %s114 = sphi 0, %s98
    %s122 = sphi 0, %s124
    %s125 = sphi 0, %s122
    %s126 = sphi 0, %s125
    %s142 = sphi 0, %s126
  $region4: #{conv_bn_relu_nchw.1} parent=0 // loop_header_branch
    %12 = sbr.rel (%p10) target = $region8
  $region5: #{conv_bn_relu_nchw.1} parent=0 // loop_body
    %s14 = ssub.s32 %s9, 1
    %s15 = ssub.s32 %s9, 2
    %s25 = sadd.s32 1, %s18
    %p26 = scmp.ge.s32.totalorder %s25, 1
    %s27 = scalar_select %p26, 0, %s25
    %s28 = sadd.s32 1, %s17
    %s29 = scalar_select %p26, %s28, %s17
    %p30 = scmp.ge.s32.totalorder %s29, 1
    %s31 = scalar_select %p30, 0, %s29
    %s32 = sadd.s32 1, %s16
    %s33 = scalar_select %p30, %s32, %s16
    %p34 = scmp.ge.s32.totalorder %s33, 2
    %s35 = scalar_select %p34, 0, %s33
    %s36 = ssub.s32 %s16, %s35
    %s37 = ssub.s32 %s18, %s27
    %s38 = sor.u32 %s36, %s37
    %p39 = scmp.eq.s32.totalorder %s38, 0
    %s41 = sadd.s32 %s40, 1
    %s42 = scalar_select %p39, %s40, %s41
    %p45 = pneg %p39
    %p46 = scmp.eq.s32.totalorder %s9, 1
    %p47 = por %p45, %p46
    %p48 = scmp.ne.s32.totalorder %s40, %s43
    %p49 = scmp.eq.s32.totalorder %s9, 0
    %p50 = por %p48, %p49
    %p51 = scmp.ne.s32.totalorder %s40, %s43
    %p52 = scmp.eq.s32.totalorder %s14, 1
    %p53 = por %p51, %p52
    %p54 = scmp.ne.s32.totalorder %s43, %s44
    %p55 = scmp.eq.s32.totalorder %s14, 0
    %p56 = por %p54, %p55
    %p57 = scmp.ne.s32.totalorder %s43, %s44
    %p58 = scmp.eq.s32.totalorder %s15, 1
    %p59 = por %p57, %p58
    %p61 = scmp.ne.s32.totalorder %s44, %s60
    %p62 = scmp.eq.s32.totalorder %s15, 0
    %p63 = por %p61, %p62
    %s64 = ssub.s32 %s18, %s27
    %s65 = ssub.s32 %s17, %s31
    %s66 = sor.u32 %s64, %s65
    %p67 = scmp.eq.s32.totalorder %s66, 0
    %s69 = sadd.s32 %s68, 1
    %s70 = scalar_select %p67, %s68, %s69
    %p73 = pneg %p67
    %p74 = scmp.eq.s32.totalorder %s9, 1
    %p75 = por %p73, %p74
    %p76 = scmp.ne.s32.totalorder %s68, %s71
    %p77 = scmp.eq.s32.totalorder %s9, 0
    %p78 = por %p76, %p77
    %p79 = scmp.ne.s32.totalorder %s68, %s71
    %p80 = scmp.eq.s32.totalorder %s14, 1
    %p81 = por %p79, %p80
    %p82 = scmp.ne.s32.totalorder %s71, %s72
    %p83 = scmp.eq.s32.totalorder %s14, 0
    %p84 = por %p82, %p83
    %p85 = scmp.ne.s32.totalorder %s71, %s72
    %p86 = scmp.eq.s32.totalorder %s15, 1
    %p87 = por %p85, %p86
    %p89 = scmp.ne.s32.totalorder %s72, %s88
    %p90 = scmp.eq.s32.totalorder %s15, 0
    %p91 = por %p89, %p90
    %s92 = ssub.s32 %s17, %s31
    %p93 = scmp.eq.s32.totalorder %s92, 0
    %s95 = sadd.s32 %s94, 1
    %s96 = scalar_select %p93, %s94, %s95
    %p99 = pneg %p93
    %p100 = scmp.eq.s32.totalorder %s9, 1
    %p101 = por %p99, %p100
    %p102 = scmp.ne.s32.totalorder %s94, %s97
    %p103 = scmp.eq.s32.totalorder %s9, 0
    %p104 = por %p102, %p103
    %p105 = scmp.ne.s32.totalorder %s94, %s97
    %p106 = scmp.eq.s32.totalorder %s14, 1
    %p107 = por %p105, %p106
    %p108 = scmp.ne.s32.totalorder %s97, %s98
    %p109 = scmp.eq.s32.totalorder %s14, 0
    %p110 = por %p108, %p109
    %p111 = scmp.ne.s32.totalorder %s97, %s98
    %p112 = scmp.eq.s32.totalorder %s15, 1
    %p113 = por %p111, %p112
    %p115 = scmp.ne.s32.totalorder %s98, %s114
    %p116 = scmp.eq.s32.totalorder %s15, 0
    %p117 = por %p115, %p116
    %s118 = ssub.s32 %s16, %s35
    %s119 = ssub.s32 %s17, %s31
    %s120 = sor.u32 %s118, %s119
    %p121 = scmp.eq.s32.totalorder %s120, 0
    %s123 = sadd.s32 %s122, 1
    %s124 = scalar_select %p121, %s122, %s123
    %p127 = pneg %p121
    %p128 = scmp.eq.s32.totalorder %s9, 1
    %p129 = por %p127, %p128
    %p130 = scmp.ne.s32.totalorder %s122, %s125
    %p131 = scmp.eq.s32.totalorder %s9, 0
    %p132 = por %p130, %p131
    %p133 = scmp.ne.s32.totalorder %s122, %s125
    %p134 = scmp.eq.s32.totalorder %s14, 1
    %p135 = por %p133, %p134
    %p136 = scmp.ne.s32.totalorder %s125, %s126
    %p137 = scmp.eq.s32.totalorder %s14, 0
    %p138 = por %p136, %p137
    %p139 = scmp.ne.s32.totalorder %s125, %s126
    %p140 = scmp.eq.s32.totalorder %s15, 1
    %p141 = por %p139, %p140
    %p143 = scmp.ne.s32.totalorder %s126, %s142
    %p144 = scmp.eq.s32.totalorder %s15, 0
    %p145 = por %p143, %p144
    %p146 = scmp.le.s32.totalorder 1, %s9
    %p147 = scmp.lt.s32.totalorder %s9, 3
    %p148 = pnand %p146, %p147
    %p149 = pneg %p148
    // Predicated region
    $region9: #{conv_bn_relu_nchw.1} parent=5 // pred_check
      _
    $region10: #{conv_bn_relu_nchw.1} parent=5 // pred_check_branch
      %151 = sbr.rel (%p148) target = $region12
    $region11: #{conv_bn_relu_nchw.1} parent=5 // pred_region
      %s152 = ssub.s32 %s9, 1
      // Predicated region
      $region13: #{conv_bn_relu_nchw.1} parent=11 // pred_check
        %p153 = pneg %p84
      $region14: #{conv_bn_relu_nchw.1} parent=11 // pred_check_branch
        %155 = sbr.rel (%p153) target = $region16
      $region15: #{conv_bn_relu_nchw.1} parent=11 // pred_region
        %s156 = smul.u32 5, %s21
        %p157 = scmp.lt.s32.totalorder %s156, 4
        %s158 = scalar_select %p157, %s156, 4
        %p159 = scmp.lt.s32.totalorder %s20, 0
        %s160 = scalar_select %p159, %s20, 0
        %s161 = sadd.s32 %s160, %s158
        %s162 = smul.addr %s161, 4
        %s163 = scalar_lea.vmem %s1, %s162
        %s164 = smul.u32 5, %s21
      $region16: #{conv_bn_relu_nchw.1} parent=11 // pred_fallthru
        _
      // Predicated region
      $region17: #{conv_bn_relu_nchw.1} parent=11 // pred_check
        %p165 = pneg %p110
      $region18: #{conv_bn_relu_nchw.1} parent=11 // pred_check_branch
        %167 = sbr.rel (%p165) target = $region20
      $region19: #{conv_bn_relu_nchw.1} parent=11 // pred_region
        %p168 = scmp.lt.s32.totalorder %s20, 0
        %s169 = scalar_select %p168, %s20, 0
        %s170 = scalar_lea.vmem %s2, %s169
      $region20: #{conv_bn_relu_nchw.1} parent=11 // pred_fallthru
        _
    $region12: #{conv_bn_relu_nchw.1} parent=5 // pred_fallthru
      _
    %p171 = scmp.lt.s32.totalorder %s9, 2
    // Predicated region
    $region21: #{conv_bn_relu_nchw.1} parent=5 // pred_check
      %p172 = pneg %p171
    $region22: #{conv_bn_relu_nchw.1} parent=5 // pred_check_branch
      %174 = sbr.rel (%p172) target = $region24
    $region23: #{conv_bn_relu_nchw.1} parent=5 // pred_region
      // Predicated region
      $region25: #{conv_bn_relu_nchw.1} parent=23 // pred_check
        %p175 = pneg %p50
      $region26: #{conv_bn_relu_nchw.1} parent=23 // pred_check_branch
        %177 = sbr.rel (%p175) target = $region28
      $region27: #{conv_bn_relu_nchw.1} parent=23 // pred_region
        %s178 = smul.u32 32, %s16
        %p179 = scmp.lt.s32.totalorder %s178, 63
        %s180 = scalar_select %p179, %s178, 63
        %p181 = scmp.lt.s32.totalorder %s18, 0
        %s182 = scalar_select %p181, %s18, 0
        %s183 = sadd.s32 %s182, %s180
        %s184 = smul.addr %s183, 4
        %s185 = scalar_lea.vmem %s0, %s184
        %s186 = smul.u32 32, %s16
      $region28: #{conv_bn_relu_nchw.1} parent=23 // pred_fallthru
        _
    $region24: #{conv_bn_relu_nchw.1} parent=5 // pred_fallthru
      _
    %p187 = scmp.le.s32.totalorder 1, %s9
    %p188 = scmp.lt.s32.totalorder %s9, 3
    %p189 = pnand %p187, %p188
    %p190 = pneg %p189
    // Predicated region
    $region29: #{conv_bn_relu_nchw.1} parent=5 // pred_check
      _
    $region30: #{conv_bn_relu_nchw.1} parent=5 // pred_check_branch
      %192 = sbr.rel (%p189) target = $region32
    $region31: #{conv_bn_relu_nchw.1} parent=5 // pred_region
      %s193 = ssub.s32 %s9, 1
      %s194 = smul.u32 32, %s19
      %p195 = scmp.lt.s32.totalorder %s194, 63
      %s196 = scalar_select %p195, %s194, 63
      %p197 = scmp.lt.s32.totalorder %s21, 0
      %s198 = scalar_select %p197, %s21, 0
      %s199 = sadd.s32 %s198, %s196
      %s200 = smul.addr %s199, 4
      %s201 = scalar_lea.vmem %s0, %s200
      %p202 = pneg %p56
      %p203 = pneg %p53
      %s204 = smul.u32 5, %s21
      %p205 = scmp.lt.s32.totalorder %s204, 4
      %s206 = scalar_select %p205, %s204, 4
      %p207 = scmp.lt.s32.totalorder %s20, 0
      %s208 = scalar_select %p207, %s20, 0
      %s209 = sadd.s32 %s208, %s206
      %s210 = smul.addr %s209, 4
      %s211 = scalar_lea.vmem %s1, %s210
      %p212 = pneg %p84
      %p213 = pneg %p81
      %p214 = scmp.lt.s32.totalorder %s20, 0
      %s215 = scalar_select %p214, %s20, 0
      %s216 = scalar_lea.vmem %s2, %s215
      %p217 = pneg %p110
      %p218 = pneg %p107
      %p219 = pneg %p138
      %p220 = pneg %p135
      %s221 = smul.u32 32, %s19
      %p222 = scmp.lt.s32.totalorder %s221, 63
      %s223 = scalar_select %p222, %s221, 63
      %p224 = scmp.lt.s32.totalorder %s20, 0
      %s225 = scalar_select %p224, %s20, 0
      %s226 = sadd.s32 %s225, %s223
      %s227 = smul.addr %s226, 4
      %s228 = scalar_lea.vmem %s3, %s227
      %s229 = smul.u32 32, %s19
      %p230 = scmp.lt.s32.totalorder %s229, 63
      %s231 = scalar_select %p230, %s229, 63
      %p232 = scmp.lt.s32.totalorder %s21, 0
      %s233 = scalar_select %p232, %s21, 0
      %s234 = sadd.s32 %s233, %s231
      %s235 = smul.addr %s234, 4
      %s236 = scalar_lea.vmem %s0, %s235
      %s237 = smul.u32 32, %s19
      %s238 = smul.u32 5, %s21
      %p239 = scmp.lt.s32.totalorder %s238, 4
      %s240 = scalar_select %p239, %s238, 4
      %p241 = scmp.lt.s32.totalorder %s20, 0
      %s242 = scalar_select %p241, %s20, 0
      %s243 = sadd.s32 %s242, %s240
      %s244 = smul.addr %s243, 4
      %s245 = scalar_lea.vmem %s1, %s244
      %s246 = smul.u32 5, %s21
      %p247 = scmp.lt.s32.totalorder %s20, 0
      %s248 = scalar_select %p247, %s20, 0
      %s249 = scalar_lea.vmem %s2, %s248
      %s250 = smul.u32 32, %s19
      %p251 = scmp.lt.s32.totalorder %s250, 63
      %s252 = scalar_select %p251, %s250, 63
      %p253 = scmp.lt.s32.totalorder %s20, 0
      %s254 = scalar_select %p253, %s20, 0
      %s255 = sadd.s32 %s254, %s252
      %s256 = smul.addr %s255, 4
      %s257 = scalar_lea.vmem %s3, %s256
      %s258 = smul.u32 32, %s19
      %v260 = vld [vmem:[%s236] sm:$0xf]
      %v261 = vld [vmem:[%s236 + $0x4] sm:$0xf]
      %v262 = vld [vmem:[%s236 + $0x8] sm:$0xf]
      %v263 = vld [vmem:[%s236 + $0xc] sm:$0xf]
      %v264 = vld [vmem:[%s236 + $0x10] sm:$0xf]
      %v265 = vld [vmem:[%s236 + $0x14] sm:$0xf]
      %v266 = vld [vmem:[%s236 + $0x18] sm:$0xf]
      %v267 = vld [vmem:[%s236 + $0x1c] sm:$0xf]
      %v268 = vld [vmem:[%s236 + $0x20] sm:$0xf]
      %v269 = vld [vmem:[%s236 + $0x24] sm:$0xf]
      %v270 = vld [vmem:[%s236 + $0x28] sm:$0xf]
      %v271 = vld [vmem:[%s236 + $0x2c] sm:$0xf]
      %v272 = vld [vmem:[%s236 + $0x30] sm:$0xf]
      %v273 = vld [vmem:[%s236 + $0x34] sm:$0xf]
      %v274 = vld [vmem:[%s236 + $0x38] sm:$0xf]
      %v275 = vld [vmem:[%s236 + $0x3c] sm:$0xf]
      %v276 = vld [vmem:[%s236 + $0x40] sm:$0xf]
      %v277 = vld [vmem:[%s236 + $0x44] sm:$0xf]
      %v278 = vld [vmem:[%s236 + $0x48] sm:$0xf]
      %v279 = vld [vmem:[%s236 + $0x4c] sm:$0xf]
      %v280 = vld [vmem:[%s236 + $0x50] sm:$0xf]
      %v281 = vld [vmem:[%s236 + $0x54] sm:$0xf]
      %v282 = vld [vmem:[%s236 + $0x58] sm:$0xf]
      %v283 = vld [vmem:[%s236 + $0x5c] sm:$0xf]
      %v284 = vld [vmem:[%s236 + $0x60] sm:$0xf]
      %v285 = vld [vmem:[%s236 + $0x64] sm:$0xf]
      %v286 = vld [vmem:[%s236 + $0x68] sm:$0xf]
      %v287 = vld [vmem:[%s236 + $0x6c] sm:$0xf]
      %v288 = vld [vmem:[%s236 + $0x70] sm:$0xf]
      %v289 = vld [vmem:[%s236 + $0x74] sm:$0xf]
      %v290 = vld [vmem:[%s236 + $0x78] sm:$0xf]
      %v291 = vld [vmem:[%s236 + $0x7c] sm:$0xf]
      %v292 = vld [vmem:[%s245] sm:$0xf]
      %v293 = vld [vmem:[%s245 + $0x4] sm:$0xf]
      %v294 = vld [vmem:[%s245 + $0x8] sm:$0xf]
      %v295 = vld [vmem:[%s245 + $0xc] sm:$0xf]
      %v296 = vld [vmem:[%s245 + $0x10] sm:$0x3]
      %v329 = vunpack.c.l.b16 %v260
      %v330 = vunpack.c.l.b16 %v261
      %v331 = vunpack.c.l.b16 %v262
      %v332 = vunpack.c.l.b16 %v263
      %v333 = vunpack.c.l.b16 %v264
      %v334 = vunpack.c.l.b16 %v265
      %v335 = vunpack.c.l.b16 %v266
      %v336 = vunpack.c.l.b16 %v267
      %v337 = vunpack.c.l.b16 %v268
      %v338 = vunpack.c.l.b16 %v269
      %v339 = vunpack.c.l.b16 %v270
      %v340 = vunpack.c.l.b16 %v271
      %v341 = vunpack.c.l.b16 %v272
      %v342 = vunpack.c.l.b16 %v273
      %v343 = vunpack.c.l.b16 %v274
      %v344 = vunpack.c.l.b16 %v275
      %v345 = vunpack.c.l.b16 %v276
      %v346 = vunpack.c.l.b16 %v277
      %v347 = vunpack.c.l.b16 %v278
      %v348 = vunpack.c.l.b16 %v279
      %v349 = vunpack.c.l.b16 %v280
      %v350 = vunpack.c.l.b16 %v281
      %v351 = vunpack.c.l.b16 %v282
      %v352 = vunpack.c.l.b16 %v283
      %v353 = vunpack.c.l.b16 %v284
      %v354 = vunpack.c.l.b16 %v285
      %v355 = vunpack.c.l.b16 %v286
      %v356 = vunpack.c.l.b16 %v287
      %v357 = vunpack.c.l.b16 %v288
      %v358 = vunpack.c.l.b16 %v289
      %v359 = vunpack.c.l.b16 %v290
      %v360 = vunpack.c.l.b16 %v291
      %v361 = vpack.c.b16 %v330, %v329
      %v362 = vpack.c.b16 %v332, %v331
      %v363 = vpack.c.b16 %v334, %v333
      %v364 = vpack.c.b16 %v336, %v335
      %v365 = vpack.c.b16 %v338, %v337
      %v366 = vpack.c.b16 %v340, %v339
      %v367 = vpack.c.b16 %v342, %v341
      %v368 = vpack.c.b16 %v344, %v343
      %v369 = vpack.c.b16 %v346, %v345
      %v370 = vpack.c.b16 %v348, %v347
      %v371 = vpack.c.b16 %v350, %v349
      %v372 = vpack.c.b16 %v352, %v351
      %v373 = vpack.c.b16 %v354, %v353
      %v374 = vpack.c.b16 %v356, %v355
      %v375 = vpack.c.b16 %v358, %v357
      %v376 = vpack.c.b16 %v360, %v359
      %v382 = vunpack.c.l.b16 %v292
      %v383 = vunpack.c.l.b16 %v293
      %v384 = vunpack.c.l.b16 %v294
      %v385 = vunpack.c.l.b16 %v295
      %v386 = vunpack.c.l.b16 %v296
      %v387 = vpack.c.b16 %v383, %v382
      %v388 = vpack.c.b16 %v385, %v384
      %v389 = vpack.c.b16 %v386, %v386
      %vm392 = vcmask 293888
      %v394 = vsel %vm392, %v361, 0
      %v397 = vsel %vm392, %v362, 0
      %v400 = vsel %vm392, %v363, 0
      %v403 = vsel %vm392, %v364, 0
      %v406 = vsel %vm392, %v365, 0
      %v409 = vsel %vm392, %v366, 0
      %v412 = vsel %vm392, %v367, 0
      %v415 = vsel %vm392, %v368, 0
      %v418 = vsel %vm392, %v369, 0
      %v421 = vsel %vm392, %v370, 0
      %v424 = vsel %vm392, %v371, 0
      %v427 = vsel %vm392, %v372, 0
      %v430 = vsel %vm392, %v373, 0
      %v433 = vsel %vm392, %v374, 0
      %v436 = vsel %vm392, %v375, 0
      %v439 = vsel %vm392, %v376, 0
      %vm441 = vcmask 1041408
      %v443 = vsel %vm441, %v389, 0
      %445 = vmatprep.subr.bf16.mxu0 0
      %446 = vmatpush1.bf16.msra.mxu0 %v387
      %447 = vmatprep.subr.bf16.mxu0 0
      %448 = vmatpush1.bf16.msra.mxu0 %v388
      %449 = vmatprep.subr.bf16.mxu0 0
      %450 = vmatpush1.bf16.msra.mxu0 %v443
      %451 = vmatprep.subr.bf16.mxu0 0
      %452 = vmatpush1.bf16.msra.mxu0 0
      %453 = vmatprep.subr.bf16.mxu0 0
      %454 = vmatpush1.bf16.msra.mxu0 0
      %455 = vmatprep.subr.bf16.mxu0 0
      %456 = vmatpush1.bf16.msra.mxu0 0
      %457 = vmatprep.subr.bf16.mxu0 0
      %458 = vmatpush1.bf16.msra.mxu0 0
      %459 = vmatprep.subr.bf16.mxu0 0
      %460 = vmatpush1.bf16.msra.mxu0 0
      %461 = vmatprep.subr.bf16.mxu0 0
      %462 = vmatpush1.bf16.msra.mxu0 0
      %463 = vmatprep.subr.bf16.mxu0 0
      %464 = vmatpush1.bf16.msra.mxu0 0
      %465 = vmatprep.subr.bf16.mxu0 0
      %466 = vmatpush1.bf16.msra.mxu0 0
      %467 = vmatprep.subr.bf16.mxu0 0
      %468 = vmatpush1.bf16.msra.mxu0 0
      %469 = vmatprep.subr.bf16.mxu0 0
      %470 = vmatpush1.bf16.msra.mxu0 0
      %471 = vmatprep.subr.bf16.mxu0 0
      %472 = vmatpush1.bf16.msra.mxu0 0
      %473 = vmatprep.subr.bf16.mxu0 0
      %474 = vmatpush1.bf16.msra.mxu0 0
      %475 = vmatprep.subr.bf16.mxu0 0
      %476 = vmatpush1.bf16.msra.mxu0 0
      %477 = vmatprep.mubr.bf16.mxu0 0
      %478 = vmatmul.mubr.bf16.gmra.mrb[0].mxu0 %v394
      %v479 = vpop.f32.mrb[0].mxu0
      %v480 = vadd.f32 0.0, %v479
      %v481 = vpop.f32.mrb[0].mxu0
      %v482 = vpop.f32.mrb[0].mxu0
      %v483 = vadd.f32 0.0, %v482
      %v484 = vpop.f32.mrb[0].mxu0
      %485 = vmatprep.mubr.bf16.mxu0 0
      %486 = vmatmul.mubr.bf16.gmra.mrb[0].mxu0 %v397
      %v487 = vpop.f32.mrb[0].mxu0
      %v488 = vadd.f32 0.0, %v487
      %v489 = vpop.f32.mrb[0].mxu0
      %v490 = vpop.f32.mrb[0].mxu0
      %v491 = vadd.f32 0.0, %v490
      %v492 = vpop.f32.mrb[0].mxu0
      %493 = vmatprep.mubr.bf16.mxu0 0
      %494 = vmatmul.mubr.bf16.gmra.mrb[0].mxu0 %v400
      %v495 = vpop.f32.mrb[0].mxu0
      %v496 = vadd.f32 0.0, %v495
      %v497 = vpop.f32.mrb[0].mxu0
      %v498 = vpop.f32.mrb[0].mxu0
      %v499 = vadd.f32 0.0, %v498
      %v500 = vpop.f32.mrb[0].mxu0
      %501 = vmatprep.mubr.bf16.mxu0 0
      %502 = vmatmul.mubr.bf16.gmra.mrb[0].mxu0 %v403
      %v503 = vpop.f32.mrb[0].mxu0
      %v504 = vadd.f32 0.0, %v503
      %v505 = vpop.f32.mrb[0].mxu0
      %v506 = vpop.f32.mrb[0].mxu0
      %v507 = vadd.f32 0.0, %v506
      %v508 = vpop.f32.mrb[0].mxu0
      %509 = vmatprep.mubr.bf16.mxu0 0
      %510 = vmatmul.mubr.bf16.gmra.mrb[0].mxu0 %v406
      %v511 = vpop.f32.mrb[0].mxu0
      %v512 = vadd.f32 0.0, %v511
      %v513 = vpop.f32.mrb[0].mxu0
      %v514 = vpop.f32.mrb[0].mxu0
      %v515 = vadd.f32 0.0, %v514
      %v516 = vpop.f32.mrb[0].mxu0
      %517 = vmatprep.mubr.bf16.mxu0 0
      %518 = vmatmul.mubr.bf16.gmra.mrb[0].mxu0 %v409
      %v519 = vpop.f32.mrb[0].mxu0
      %v520 = vadd.f32 0.0, %v519
      %v521 = vpop.f32.mrb[0].mxu0
      %v522 = vpop.f32.mrb[0].mxu0
      %v523 = vadd.f32 0.0, %v522
      %v524 = vpop.f32.mrb[0].mxu0
      %525 = vmatprep.mubr.bf16.mxu0 0
      %526 = vmatmul.mubr.bf16.gmra.mrb[0].mxu0 %v412
      %v527 = vpop.f32.mrb[0].mxu0
      %v528 = vadd.f32 0.0, %v527
      %v529 = vpop.f32.mrb[0].mxu0
      %v530 = vpop.f32.mrb[0].mxu0
      %v531 = vadd.f32 0.0, %v530
      %v532 = vpop.f32.mrb[0].mxu0
      %533 = vmatprep.mubr.bf16.mxu0 0
      %534 = vmatmul.mubr.bf16.gmra.mrb[0].mxu0 %v415
      %v535 = vpop.f32.mrb[0].mxu0
      %v536 = vadd.f32 0.0, %v535
      %v537 = vpop.f32.mrb[0].mxu0
      %v538 = vpop.f32.mrb[0].mxu0
      %v539 = vadd.f32 0.0, %v538
      %v540 = vpop.f32.mrb[0].mxu0
      %541 = vmatprep.mubr.bf16.mxu0 0
      %542 = vmatmul.mubr.bf16.gmra.mrb[0].mxu0 %v418
      %v543 = vpop.f32.mrb[0].mxu0
      %v544 = vadd.f32 0.0, %v543
      %v545 = vpop.f32.mrb[0].mxu0
      %v546 = vpop.f32.mrb[0].mxu0
      %v547 = vadd.f32 0.0, %v546
      %v548 = vpop.f32.mrb[0].mxu0
      %549 = vmatprep.mubr.bf16.mxu0 0
      %550 = vmatmul.mubr.bf16.gmra.mrb[0].mxu0 %v421
      %v551 = vpop.f32.mrb[0].mxu0
      %v552 = vadd.f32 0.0, %v551
      %v553 = vpop.f32.mrb[0].mxu0
      %v554 = vpop.f32.mrb[0].mxu0
      %v555 = vadd.f32 0.0, %v554
      %v556 = vpop.f32.mrb[0].mxu0
      %557 = vmatprep.mubr.bf16.mxu0 0
      %558 = vmatmul.mubr.bf16.gmra.mrb[0].mxu0 %v424
      %v559 = vpop.f32.mrb[0].mxu0
      %v560 = vadd.f32 0.0, %v559
      %v561 = vpop.f32.mrb[0].mxu0
      %v562 = vpop.f32.mrb[0].mxu0
      %v563 = vadd.f32 0.0, %v562
      %v564 = vpop.f32.mrb[0].mxu0
      %565 = vmatprep.mubr.bf16.mxu0 0
      %566 = vmatmul.mubr.bf16.gmra.mrb[0].mxu0 %v427
      %v567 = vpop.f32.mrb[0].mxu0
      %v568 = vadd.f32 0.0, %v567
      %v569 = vpop.f32.mrb[0].mxu0
      %v570 = vpop.f32.mrb[0].mxu0
      %v571 = vadd.f32 0.0, %v570
      %v572 = vpop.f32.mrb[0].mxu0
      %573 = vmatprep.mubr.bf16.mxu0 0
      %574 = vmatmul.mubr.bf16.gmra.mrb[0].mxu0 %v430
      %v575 = vpop.f32.mrb[0].mxu0
      %v576 = vadd.f32 0.0, %v575
      %v577 = vpop.f32.mrb[0].mxu0
      %v578 = vpop.f32.mrb[0].mxu0
      %v579 = vadd.f32 0.0, %v578
      %v580 = vpop.f32.mrb[0].mxu0
      %581 = vmatprep.mubr.bf16.mxu0 0
      %582 = vmatmul.mubr.bf16.gmra.mrb[0].mxu0 %v433
      %v583 = vpop.f32.mrb[0].mxu0
      %v584 = vadd.f32 0.0, %v583
      %v585 = vpop.f32.mrb[0].mxu0
      %v586 = vpop.f32.mrb[0].mxu0
      %v587 = vadd.f32 0.0, %v586
      %v588 = vpop.f32.mrb[0].mxu0
      %589 = vmatprep.mubr.bf16.mxu0 0
      %590 = vmatmul.mubr.bf16.gmra.mrb[0].mxu0 %v436
      %v591 = vpop.f32.mrb[0].mxu0
      %v592 = vadd.f32 0.0, %v591
      %v593 = vpop.f32.mrb[0].mxu0
      %v594 = vpop.f32.mrb[0].mxu0
      %v595 = vadd.f32 0.0, %v594
      %v596 = vpop.f32.mrb[0].mxu0
      %597 = vmatprep.mubr.bf16.mxu0 0
      %598 = vmatmul.mubr.bf16.gmra.mrb[0].mxu0 %v439
      %v599 = vpop.f32.mrb[0].mxu0
      %v600 = vadd.f32 0.0, %v599
      %v601 = vpop.f32.mrb[0].mxu0
      %v602 = vpop.f32.mrb[0].mxu0
      %v603 = vadd.f32 0.0, %v602
      %v604 = vpop.f32.mrb[0].mxu0
      %605 = vdwg.mxu0
      %p606 = scmp.eq.s32.totalorder %s21, 0
      // Predicated region
      $region33: #{conv_bn_relu_nchw.1} parent=31 // pred_check
        %p607 = pneg %p606
      $region34: #{conv_bn_relu_nchw.1} parent=31 // pred_check_branch
        %609 = sbr.rel (%p607) target = $region36
      $region35: #{conv_bn_relu_nchw.1} parent=31 // pred_region
        %610 = vst [vmem:[#allocation2] sm:$0xff] %v480
        %611 = vst [vmem:[#allocation2 + $0x8] sm:$0xff] %v483
        %612 = vst [vmem:[#allocation2 + $0x10] sm:$0xff] %v488
        %613 = vst [vmem:[#allocation2 + $0x18] sm:$0xff] %v491
        %614 = vst [vmem:[#allocation2 + $0x20] sm:$0xff] %v496
        %615 = vst [vmem:[#allocation2 + $0x28] sm:$0xff] %v499
        %616 = vst [vmem:[#allocation2 + $0x30] sm:$0xff] %v504
        %617 = vst [vmem:[#allocation2 + $0x38] sm:$0xff] %v507
        %618 = vst [vmem:[#allocation2 + $0x40] sm:$0xff] %v512
        %619 = vst [vmem:[#allocation2 + $0x48] sm:$0xff] %v515
        %620 = vst [vmem:[#allocation2 + $0x50] sm:$0xff] %v520
        %621 = vst [vmem:[#allocation2 + $0x58] sm:$0xff] %v523
        %622 = vst [vmem:[#allocation2 + $0x60] sm:$0xff] %v528
        %623 = vst [vmem:[#allocation2 + $0x68] sm:$0xff] %v531
        %624 = vst [vmem:[#allocation2 + $0x70] sm:$0xff] %v536
        %625 = vst [vmem:[#allocation2 + $0x78] sm:$0xff] %v539
        %626 = vst [vmem:[#allocation2 + $0x80] sm:$0xff] %v544
        %627 = vst [vmem:[#allocation2 + $0x88] sm:$0xff] %v547
        %628 = vst [vmem:[#allocation2 + $0x90] sm:$0xff] %v552
        %629 = vst [vmem:[#allocation2 + $0x98] sm:$0xff] %v555
        %630 = vst [vmem:[#allocation2 + $0xa0] sm:$0xff] %v560
        %631 = vst [vmem:[#allocation2 + $0xa8] sm:$0xff] %v563
        %632 = vst [vmem:[#allocation2 + $0xb0] sm:$0xff] %v568
        %633 = vst [vmem:[#allocation2 + $0xb8] sm:$0xff] %v571
        %634 = vst [vmem:[#allocation2 + $0xc0] sm:$0xff] %v576
        %635 = vst [vmem:[#allocation2 + $0xc8] sm:$0xff] %v579
        %636 = vst [vmem:[#allocation2 + $0xd0] sm:$0xff] %v584
        %637 = vst [vmem:[#allocation2 + $0xd8] sm:$0xff] %v587
        %638 = vst [vmem:[#allocation2 + $0xe0] sm:$0xff] %v592
        %639 = vst [vmem:[#allocation2 + $0xe8] sm:$0xff] %v595
        %640 = vst [vmem:[#allocation2 + $0xf0] sm:$0xff] %v600
        %641 = vst [vmem:[#allocation2 + $0xf8] sm:$0xff] %v603
      $region36: #{conv_bn_relu_nchw.1} parent=31 // pred_fallthru
        _
      %p642 = scmp.gt.s32.totalorder %s21, 0
      // Predicated region
      $region37: #{conv_bn_relu_nchw.1} parent=31 // pred_check
        %p643 = pneg %p642
      $region38: #{conv_bn_relu_nchw.1} parent=31 // pred_check_branch
        %645 = sbr.rel (%p643) target = $region40
      $region39: #{conv_bn_relu_nchw.1} parent=31 // pred_region
        %v646 = vld [vmem:[#allocation2] sm:$0xff]
        %v647 = vld [vmem:[#allocation2 + $0x8] sm:$0xff]
        %v648 = vld [vmem:[#allocation2 + $0x10] sm:$0xff]
        %v649 = vld [vmem:[#allocation2 + $0x18] sm:$0xff]
        %v650 = vld [vmem:[#allocation2 + $0x20] sm:$0xff]
        %v651 = vld [vmem:[#allocation2 + $0x28] sm:$0xff]
        %v652 = vld [vmem:[#allocation2 + $0x30] sm:$0xff]
        %v653 = vld [vmem:[#allocation2 + $0x38] sm:$0xff]
        %v654 = vld [vmem:[#allocation2 + $0x40] sm:$0xff]
        %v655 = vld [vmem:[#allocation2 + $0x48] sm:$0xff]
        %v656 = vld [vmem:[#allocation2 + $0x50] sm:$0xff]
        %v657 = vld [vmem:[#allocation2 + $0x58] sm:$0xff]
        %v658 = vld [vmem:[#allocation2 + $0x60] sm:$0xff]
        %v659 = vld [vmem:[#allocation2 + $0x68] sm:$0xff]
        %v660 = vld [vmem:[#allocation2 + $0x70] sm:$0xff]
        %v661 = vld [vmem:[#allocation2 + $0x78] sm:$0xff]
        %v662 = vld [vmem:[#allocation2 + $0x80] sm:$0xff]
        %v663 = vld [vmem:[#allocation2 + $0x88] sm:$0xff]
        %v664 = vld [vmem:[#allocation2 + $0x90] sm:$0xff]
        %v665 = vld [vmem:[#allocation2 + $0x98] sm:$0xff]
        %v666 = vld [vmem:[#allocation2 + $0xa0] sm:$0xff]
        %v667 = vld [vmem:[#allocation2 + $0xa8] sm:$0xff]
        %v668 = vld [vmem:[#allocation2 + $0xb0] sm:$0xff]
        %v669 = vld [vmem:[#allocation2 + $0xb8] sm:$0xff]
        %v670 = vld [vmem:[#allocation2 + $0xc0] sm:$0xff]
        %v671 = vld [vmem:[#allocation2 + $0xc8] sm:$0xff]
        %v672 = vld [vmem:[#allocation2 + $0xd0] sm:$0xff]
        %v673 = vld [vmem:[#allocation2 + $0xd8] sm:$0xff]
        %v674 = vld [vmem:[#allocation2 + $0xe0] sm:$0xff]
        %v675 = vld [vmem:[#allocation2 + $0xe8] sm:$0xff]
        %v676 = vld [vmem:[#allocation2 + $0xf0] sm:$0xff]
        %v677 = vld [vmem:[#allocation2 + $0xf8] sm:$0xff]
        %v678 = vadd.f32 %v646, %v480
        %v679 = vadd.f32 %v647, %v483
        %v680 = vadd.f32 %v648, %v488
        %v681 = vadd.f32 %v649, %v491
        %v682 = vadd.f32 %v650, %v496
        %v683 = vadd.f32 %v651, %v499
        %v684 = vadd.f32 %v652, %v504
        %v685 = vadd.f32 %v653, %v507
        %v686 = vadd.f32 %v654, %v512
        %v687 = vadd.f32 %v655, %v515
        %v688 = vadd.f32 %v656, %v520
        %v689 = vadd.f32 %v657, %v523
        %v690 = vadd.f32 %v658, %v528
        %v691 = vadd.f32 %v659, %v531
        %v692 = vadd.f32 %v660, %v536
        %v693 = vadd.f32 %v661, %v539
        %v694 = vadd.f32 %v662, %v544
        %v695 = vadd.f32 %v663, %v547
        %v696 = vadd.f32 %v664, %v552
        %v697 = vadd.f32 %v665, %v555
        %v698 = vadd.f32 %v666, %v560
        %v699 = vadd.f32 %v667, %v563
        %v700 = vadd.f32 %v668, %v568
        %v701 = vadd.f32 %v669, %v571
        %v702 = vadd.f32 %v670, %v576
        %v703 = vadd.f32 %v671, %v579
        %v704 = vadd.f32 %v672, %v584
        %v705 = vadd.f32 %v673, %v587
        %v706 = vadd.f32 %v674, %v592
        %v707 = vadd.f32 %v675, %v595
        %v708 = vadd.f32 %v676, %v600
        %v709 = vadd.f32 %v677, %v603
        %710 = vst [vmem:[#allocation2] sm:$0xff] %v678
        %711 = vst [vmem:[#allocation2 + $0x8] sm:$0xff] %v679
        %712 = vst [vmem:[#allocation2 + $0x10] sm:$0xff] %v680
        %713 = vst [vmem:[#allocation2 + $0x18] sm:$0xff] %v681
        %714 = vst [vmem:[#allocation2 + $0x20] sm:$0xff] %v682
        %715 = vst [vmem:[#allocation2 + $0x28] sm:$0xff] %v683
        %716 = vst [vmem:[#allocation2 + $0x30] sm:$0xff] %v684
        %717 = vst [vmem:[#allocation2 + $0x38] sm:$0xff] %v685
        %718 = vst [vmem:[#allocation2 + $0x40] sm:$0xff] %v686
        %719 = vst [vmem:[#allocation2 + $0x48] sm:$0xff] %v687
        %720 = vst [vmem:[#allocation2 + $0x50] sm:$0xff] %v688
        %721 = vst [vmem:[#allocation2 + $0x58] sm:$0xff] %v689
        %722 = vst [vmem:[#allocation2 + $0x60] sm:$0xff] %v690
        %723 = vst [vmem:[#allocation2 + $0x68] sm:$0xff] %v691
        %724 = vst [vmem:[#allocation2 + $0x70] sm:$0xff] %v692
        %725 = vst [vmem:[#allocation2 + $0x78] sm:$0xff] %v693
        %726 = vst [vmem:[#allocation2 + $0x80] sm:$0xff] %v694
        %727 = vst [vmem:[#allocation2 + $0x88] sm:$0xff] %v695
        %728 = vst [vmem:[#allocation2 + $0x90] sm:$0xff] %v696
        %729 = vst [vmem:[#allocation2 + $0x98] sm:$0xff] %v697
        %730 = vst [vmem:[#allocation2 + $0xa0] sm:$0xff] %v698
        %731 = vst [vmem:[#allocation2 + $0xa8] sm:$0xff] %v699
        %732 = vst [vmem:[#allocation2 + $0xb0] sm:$0xff] %v700
        %733 = vst [vmem:[#allocation2 + $0xb8] sm:$0xff] %v701
        %734 = vst [vmem:[#allocation2 + $0xc0] sm:$0xff] %v702
        %735 = vst [vmem:[#allocation2 + $0xc8] sm:$0xff] %v703
        %736 = vst [vmem:[#allocation2 + $0xd0] sm:$0xff] %v704
        %737 = vst [vmem:[#allocation2 + $0xd8] sm:$0xff] %v705
        %738 = vst [vmem:[#allocation2 + $0xe0] sm:$0xff] %v706
        %739 = vst [vmem:[#allocation2 + $0xe8] sm:$0xff] %v707
        %740 = vst [vmem:[#allocation2 + $0xf0] sm:$0xff] %v708
        %741 = vst [vmem:[#allocation2 + $0xf8] sm:$0xff] %v709
      $region40: #{conv_bn_relu_nchw.1} parent=31 // pred_fallthru
        _
      // Predicated region
      $region41: #{conv_bn_relu_nchw.1} parent=31 // pred_check
        %p742 = pneg %p606
      $region42: #{conv_bn_relu_nchw.1} parent=31 // pred_check_branch
        %744 = sbr.rel (%p742) target = $region44
      $region43: #{conv_bn_relu_nchw.1} parent=31 // pred_region
        %v745 = vld [vmem:[#allocation2] sm:$0xff]
        %v746 = vld [vmem:[#allocation2 + $0x8] sm:$0xff]
        %v747 = vld [vmem:[#allocation2 + $0x10] sm:$0xff]
        %v748 = vld [vmem:[#allocation2 + $0x18] sm:$0xff]
        %v749 = vld [vmem:[#allocation2 + $0x20] sm:$0xff]
        %v750 = vld [vmem:[#allocation2 + $0x28] sm:$0xff]
        %v751 = vld [vmem:[#allocation2 + $0x30] sm:$0xff]
        %v752 = vld [vmem:[#allocation2 + $0x38] sm:$0xff]
        %v753 = vld [vmem:[#allocation2 + $0x40] sm:$0xff]
        %v754 = vld [vmem:[#allocation2 + $0x48] sm:$0xff]
        %v755 = vld [vmem:[#allocation2 + $0x50] sm:$0xff]
        %v756 = vld [vmem:[#allocation2 + $0x58] sm:$0xff]
        %v757 = vld [vmem:[#allocation2 + $0x60] sm:$0xff]
        %v758 = vld [vmem:[#allocation2 + $0x68] sm:$0xff]
        %v759 = vld [vmem:[#allocation2 + $0x70] sm:$0xff]
        %v760 = vld [vmem:[#allocation2 + $0x78] sm:$0xff]
        %v761 = vld [vmem:[#allocation2 + $0x80] sm:$0xff]
        %v762 = vld [vmem:[#allocation2 + $0x88] sm:$0xff]
        %v763 = vld [vmem:[#allocation2 + $0x90] sm:$0xff]
        %v764 = vld [vmem:[#allocation2 + $0x98] sm:$0xff]
        %v765 = vld [vmem:[#allocation2 + $0xa0] sm:$0xff]
        %v766 = vld [vmem:[#allocation2 + $0xa8] sm:$0xff]
        %v767 = vld [vmem:[#allocation2 + $0xb0] sm:$0xff]
        %v768 = vld [vmem:[#allocation2 + $0xb8] sm:$0xff]
        %v769 = vld [vmem:[#allocation2 + $0xc0] sm:$0xff]
        %v770 = vld [vmem:[#allocation2 + $0xc8] sm:$0xff]
        %v771 = vld [vmem:[#allocation2 + $0xd0] sm:$0xff]
        %v772 = vld [vmem:[#allocation2 + $0xd8] sm:$0xff]
        %v773 = vld [vmem:[#allocation2 + $0xe0] sm:$0xff]
        %v774 = vld [vmem:[#allocation2 + $0xe8] sm:$0xff]
        %v775 = vld [vmem:[#allocation2 + $0xf0] sm:$0xff]
        %v776 = vld [vmem:[#allocation2 + $0xf8] sm:$0xff]
        %v777 = vld [vmem:[%s249] sm:$0x1]
        %v779 = vlaneseq
        %v780 = vshrl.u32 %v779, 7
        %v781 = vsub.s32 0, %v780
        %v782 = vrot.slane %v777, %v781
        %v784 = vadd.f32 %v745, %v782
        %v785 = vadd.f32 %v746, %v782
        %v786 = vadd.f32 %v747, %v782
        %v787 = vadd.f32 %v748, %v782
        %v788 = vadd.f32 %v749, %v782
        %v789 = vadd.f32 %v750, %v782
        %v790 = vadd.f32 %v751, %v782
        %v791 = vadd.f32 %v752, %v782
        %v792 = vadd.f32 %v753, %v782
        %v793 = vadd.f32 %v754, %v782
        %v794 = vadd.f32 %v755, %v782
        %v795 = vadd.f32 %v756, %v782
        %v796 = vadd.f32 %v757, %v782
        %v797 = vadd.f32 %v758, %v782
        %v798 = vadd.f32 %v759, %v782
        %v799 = vadd.f32 %v760, %v782
        %v800 = vadd.f32 %v761, %v782
        %v801 = vadd.f32 %v762, %v782
        %v802 = vadd.f32 %v763, %v782
        %v803 = vadd.f32 %v764, %v782
        %v804 = vadd.f32 %v765, %v782
        %v805 = vadd.f32 %v766, %v782
        %v806 = vadd.f32 %v767, %v782
        %v807 = vadd.f32 %v768, %v782
        %v808 = vadd.f32 %v769, %v782
        %v809 = vadd.f32 %v770, %v782
        %v810 = vadd.f32 %v771, %v782
        %v811 = vadd.f32 %v772, %v782
        %v812 = vadd.f32 %v773, %v782
        %v813 = vadd.f32 %v774, %v782
        %v814 = vadd.f32 %v775, %v782
        %v815 = vadd.f32 %v776, %v782
        %v816 = vmax.f32 %v784, 0.0
        %v817 = vmax.f32 %v785, 0.0
        %v818 = vmax.f32 %v786, 0.0
        %v819 = vmax.f32 %v787, 0.0
        %v820 = vmax.f32 %v788, 0.0
        %v821 = vmax.f32 %v789, 0.0
        %v822 = vmax.f32 %v790, 0.0
        %v823 = vmax.f32 %v791, 0.0
        %v824 = vmax.f32 %v792, 0.0
        %v825 = vmax.f32 %v793, 0.0
        %v826 = vmax.f32 %v794, 0.0
        %v827 = vmax.f32 %v795, 0.0
        %v828 = vmax.f32 %v796, 0.0
        %v829 = vmax.f32 %v797, 0.0
        %v830 = vmax.f32 %v798, 0.0
        %v831 = vmax.f32 %v799, 0.0
        %v832 = vmax.f32 %v800, 0.0
        %v833 = vmax.f32 %v801, 0.0
        %v834 = vmax.f32 %v802, 0.0
        %v835 = vmax.f32 %v803, 0.0
        %v836 = vmax.f32 %v804, 0.0
        %v837 = vmax.f32 %v805, 0.0
        %v838 = vmax.f32 %v806, 0.0
        %v839 = vmax.f32 %v807, 0.0
        %v840 = vmax.f32 %v808, 0.0
        %v841 = vmax.f32 %v809, 0.0
        %v842 = vmax.f32 %v810, 0.0
        %v843 = vmax.f32 %v811, 0.0
        %v844 = vmax.f32 %v812, 0.0
        %v845 = vmax.f32 %v813, 0.0
        %v846 = vmax.f32 %v814, 0.0
        %v847 = vmax.f32 %v815, 0.0
        %v848 = vpack.c.bf16 %v817, %v816
        %v849 = vpack.c.bf16 %v819, %v818
        %v850 = vpack.c.bf16 %v821, %v820
        %v851 = vpack.c.bf16 %v823, %v822
        %v852 = vpack.c.bf16 %v825, %v824
        %v853 = vpack.c.bf16 %v827, %v826
        %v854 = vpack.c.bf16 %v829, %v828
        %v855 = vpack.c.bf16 %v831, %v830
        %v856 = vpack.c.bf16 %v833, %v832
        %v857 = vpack.c.bf16 %v835, %v834
        %v858 = vpack.c.bf16 %v837, %v836
        %v859 = vpack.c.bf16 %v839, %v838
        %v860 = vpack.c.bf16 %v841, %v840
        %v861 = vpack.c.bf16 %v843, %v842
        %v862 = vpack.c.bf16 %v845, %v844
        %v863 = vpack.c.bf16 %v847, %v846
        %v880 = vunpack.c.l.b16 %v848
        %v881 = vunpack.c.h.b16 %v848
        %v882 = vunpack.c.l.b16 %v849
        %v883 = vunpack.c.h.b16 %v849
        %v884 = vunpack.c.l.b16 %v850
        %v885 = vunpack.c.h.b16 %v850
        %v886 = vunpack.c.l.b16 %v851
        %v887 = vunpack.c.h.b16 %v851
        %v888 = vunpack.c.l.b16 %v852
        %v889 = vunpack.c.h.b16 %v852
        %v890 = vunpack.c.l.b16 %v853
        %v891 = vunpack.c.h.b16 %v853
        %v892 = vunpack.c.l.b16 %v854
        %v893 = vunpack.c.h.b16 %v854
        %v894 = vunpack.c.l.b16 %v855
        %v895 = vunpack.c.h.b16 %v855
        %v896 = vunpack.c.l.b16 %v856
        %v897 = vunpack.c.h.b16 %v856
        %v898 = vunpack.c.l.b16 %v857
        %v899 = vunpack.c.h.b16 %v857
        %v900 = vunpack.c.l.b16 %v858
        %v901 = vunpack.c.h.b16 %v858
        %v902 = vunpack.c.l.b16 %v859
        %v903 = vunpack.c.h.b16 %v859
        %v904 = vunpack.c.l.b16 %v860
        %v905 = vunpack.c.h.b16 %v860
        %v906 = vunpack.c.l.b16 %v861
        %v907 = vunpack.c.h.b16 %v861
        %v908 = vunpack.c.l.b16 %v862
        %v909 = vunpack.c.h.b16 %v862
        %v910 = vunpack.c.l.b16 %v863
        %v911 = vunpack.c.h.b16 %v863
        %v912 = vpack.c.b16 %v880, %v880
        %v913 = vpack.c.b16 %v881, %v881
        %v914 = vpack.c.b16 %v882, %v882
        %v915 = vpack.c.b16 %v883, %v883
        %v916 = vpack.c.b16 %v884, %v884
        %v917 = vpack.c.b16 %v885, %v885
        %v918 = vpack.c.b16 %v886, %v886
        %v919 = vpack.c.b16 %v887, %v887
        %v920 = vpack.c.b16 %v888, %v888
        %v921 = vpack.c.b16 %v889, %v889
        %v922 = vpack.c.b16 %v890, %v890
        %v923 = vpack.c.b16 %v891, %v891
        %v924 = vpack.c.b16 %v892, %v892
        %v925 = vpack.c.b16 %v893, %v893
        %v926 = vpack.c.b16 %v894, %v894
        %v927 = vpack.c.b16 %v895, %v895
        %v928 = vpack.c.b16 %v896, %v896
        %v929 = vpack.c.b16 %v897, %v897
        %v930 = vpack.c.b16 %v898, %v898
        %v931 = vpack.c.b16 %v899, %v899
        %v932 = vpack.c.b16 %v900, %v900
        %v933 = vpack.c.b16 %v901, %v901
        %v934 = vpack.c.b16 %v902, %v902
        %v935 = vpack.c.b16 %v903, %v903
        %v936 = vpack.c.b16 %v904, %v904
        %v937 = vpack.c.b16 %v905, %v905
        %v938 = vpack.c.b16 %v906, %v906
        %v939 = vpack.c.b16 %v907, %v907
        %v940 = vpack.c.b16 %v908, %v908
        %v941 = vpack.c.b16 %v909, %v909
        %v942 = vpack.c.b16 %v910, %v910
        %v943 = vpack.c.b16 %v911, %v911
        %976 = vst [vmem:[%s257] sm:$0xf] %v912
        %977 = vst [vmem:[%s257 + $0x4] sm:$0xf] %v913
        %978 = vst [vmem:[%s257 + $0x8] sm:$0xf] %v914
        %979 = vst [vmem:[%s257 + $0xc] sm:$0xf] %v915
        %980 = vst [vmem:[%s257 + $0x10] sm:$0xf] %v916
        %981 = vst [vmem:[%s257 + $0x14] sm:$0xf] %v917
        %982 = vst [vmem:[%s257 + $0x18] sm:$0xf] %v918
        %983 = vst [vmem:[%s257 + $0x1c] sm:$0xf] %v919
        %984 = vst [vmem:[%s257 + $0x20] sm:$0xf] %v920
        %985 = vst [vmem:[%s257 + $0x24] sm:$0xf] %v921
        %986 = vst [vmem:[%s257 + $0x28] sm:$0xf] %v922
        %987 = vst [vmem:[%s257 + $0x2c] sm:$0xf] %v923
        %988 = vst [vmem:[%s257 + $0x30] sm:$0xf] %v924
        %989 = vst [vmem:[%s257 + $0x34] sm:$0xf] %v925
        %990 = vst [vmem:[%s257 + $0x38] sm:$0xf] %v926
        %991 = vst [vmem:[%s257 + $0x3c] sm:$0xf] %v927
        %992 = vst [vmem:[%s257 + $0x40] sm:$0xf] %v928
        %993 = vst [vmem:[%s257 + $0x44] sm:$0xf] %v929
        %994 = vst [vmem:[%s257 + $0x48] sm:$0xf] %v930
        %995 = vst [vmem:[%s257 + $0x4c] sm:$0xf] %v931
        %996 = vst [vmem:[%s257 + $0x50] sm:$0xf] %v932
        %997 = vst [vmem:[%s257 + $0x54] sm:$0xf] %v933
        %998 = vst [vmem:[%s257 + $0x58] sm:$0xf] %v934
        %999 = vst [vmem:[%s257 + $0x5c] sm:$0xf] %v935
        %1000 = vst [vmem:[%s257 + $0x60] sm:$0xf] %v936
        %1001 = vst [vmem:[%s257 + $0x64] sm:$0xf] %v937
        %1002 = vst [vmem:[%s257 + $0x68] sm:$0xf] %v938
        %1003 = vst [vmem:[%s257 + $0x6c] sm:$0xf] %v939
        %1004 = vst [vmem:[%s257 + $0x70] sm:$0xf] %v940
        %1005 = vst [vmem:[%s257 + $0x74] sm:$0xf] %v941
        %1006 = vst [vmem:[%s257 + $0x78] sm:$0xf] %v942
        %1007 = vst [vmem:[%s257 + $0x7c] sm:$0xf] %v943
      $region44: #{conv_bn_relu_nchw.1} parent=31 // pred_fallthru
        _
      %s1008 = smul.u32 32, %s19
      %p1009 = scmp.lt.s32.totalorder %s1008, 63
      %s1010 = scalar_select %p1009, %s1008, 63
      %p1011 = scmp.lt.s32.totalorder %s20, 0
      %s1012 = scalar_select %p1011, %s20, 0
      %s1013 = sadd.s32 %s1012, %s1010
      %s1014 = smul.addr %s1013, 4
      %s1015 = scalar_lea.vmem %s3, %s1014
      // Predicated region
      $region45: #{conv_bn_relu_nchw.1} parent=31 // pred_check
        %p1016 = pneg %p135
      $region46: #{conv_bn_relu_nchw.1} parent=31 // pred_check_branch
        %1018 = sbr.rel (%p1016) target = $region48
      $region47: #{conv_bn_relu_nchw.1} parent=31 // pred_region
        %s1019 = smul.u32 32, %s19
      $region48: #{conv_bn_relu_nchw.1} parent=31 // pred_fallthru
        _
    $region32: #{conv_bn_relu_nchw.1} parent=5 // pred_fallthru
      _
    %p1020 = scmp.le.s32.totalorder 2, %s9
    // Predicated region
    $region49: #{conv_bn_relu_nchw.1} parent=5 // pred_check
      %p1021 = pneg %p1020
    $region50: #{conv_bn_relu_nchw.1} parent=5 // pred_check_branch
      %1023 = sbr.rel (%p1021) target = $region52
    $region51: #{conv_bn_relu_nchw.1} parent=5 // pred_region
      %s1024 = ssub.s32 %s9, 2
      // Predicated region
      $region53: #{conv_bn_relu_nchw.1} parent=51 // pred_check
        %p1025 = pneg %p141
      $region54: #{conv_bn_relu_nchw.1} parent=51 // pred_check_branch
        %1027 = sbr.rel (%p1025) target = $region56
      $region55: #{conv_bn_relu_nchw.1} parent=51 // pred_region
        %s1028 = smul.u32 32, %s22
        %p1029 = scmp.lt.s32.totalorder %s1028, 63
        %s1030 = scalar_select %p1029, %s1028, 63
        %p1031 = scmp.lt.s32.totalorder %s23, 0
        %s1032 = scalar_select %p1031, %s23, 0
        %s1033 = sadd.s32 %s1032, %s1030
        %s1034 = smul.addr %s1033, 4
        %s1035 = scalar_lea.vmem %s3, %s1034
      $region56: #{conv_bn_relu_nchw.1} parent=51 // pred_fallthru
        _
    $region52: #{conv_bn_relu_nchw.1} parent=5 // pred_fallthru
      _
  $region6: #{conv_bn_relu_nchw.1} parent=0 // loop_footer
    %s13 = sadd.s32 1, %s9
  $region7: #{conv_bn_relu_nchw.1} parent=0 // loop_footer_branch
    %8 = sbr.rel target = $region3
  $region8: #{conv_bn_relu_nchw.1} parent=0 // loop_exit
    _

</llo_original>
